<compile_context>
chip_gen: v7x
topology: tpu7x:2x2x1
jax: 0.10.0
libtpu: 0.0.40
codegen_flags: <defaults>
</compile_context>

<pallas_src>
import jax
import jax.numpy as jnp
from jax.experimental import pallas as pl
from jax.experimental.pallas import tpu as pltpu

# ---- Hyperparameters implied by the module ---------------------------------
N_FEATURES = 32          # len(feature_calculators.feature_labels())  (fc1 in)
MAX_STEP_SIZE = 5        # fc2 in
NUM_ELEM = 16            # len(element_set)                            (fc3 in)
NUM_COMP = 10            # fc4 in
INTERMEDIATE_DIM = 64    # hidden dim D
NEG_SLOPE = 0.01         # nn.LeakyReLU default

CONCAT_RAW = N_FEATURES + MAX_STEP_SIZE + NUM_ELEM + NUM_COMP   # 63
KIN = CONCAT_RAW + 1     # 64: feature rows 0..62 + all-ones bias row 63
LANES = 128
DEFAULT_BATCH_TILE = 2048   # columns (batch rows) per grid step at large B


def _round_up(x, m):
    return ((x + m - 1) // m) * m


def _leaky_relu(x):
    return jnp.where(x > 0, x, NEG_SLOPE * x)


# ---- Kernel -----------------------------------------------------------------
def dqn_kernel(x_ref, wf_ref, w5_ref, b5_ref, w6_ref, b6_ref, q_ref):
    # Branch layer, bias folded into column 63 of wf / ones row 63 of x:
    # (4D, KIN) @ (KIN, tb) -> (4D, tb)
    h = jnp.dot(wf_ref[...], x_ref[...], preferred_element_type=jnp.float32)
    h = _leaky_relu(h).astype(w5_ref.dtype)

    # fc5: (D, 4D) @ (4D, tb) -> (D, tb)
    h5 = jnp.dot(w5_ref[...], h, preferred_element_type=jnp.float32) + b5_ref[...]
    h5 = _leaky_relu(h5).astype(w6_ref.dtype)

    # fc6: (1, D) @ (D, tb) -> (1, tb)  -- lane-dense along batch
    q = jnp.dot(w6_ref[...], h5, preferred_element_type=jnp.float32) + b6_ref[...]
    q_ref[...] = q.astype(q_ref.dtype)


# ---- Wrapper-side parameter fusion (call ONCE per parameter update) ---------
def fuse_params(params, compute_dtype=jnp.float32):
    """Fused, transposed weights for the transposed (batch-on-lanes) kernel."""
    (w1, b1, w2, b2, w3, b3, w4, b4, w5, b5, w6, b6) = params
    D = INTERMEDIATE_DIM
    in_dims = (N_FEATURES, MAX_STEP_SIZE, NUM_ELEM, NUM_COMP)

    # Block-diagonal branch weight, transposed: (4D, KIN).  Column KIN-1 holds
    # the branch biases; the input slab's row KIN-1 is all-ones.
    wf = jnp.zeros((4 * D, KIN), jnp.float32)
    col = 0
    for idx, (w, b, d) in enumerate(zip((w1, w2, w3, w4),
                                        (b1, b2, b3, b4), in_dims)):
        wf = wf.at[idx * D:(idx + 1) * D, col:col + d].set(w.T)
        wf = wf.at[idx * D:(idx + 1) * D, KIN - 1].set(b[0])
        col += d

    w5_t = w5.T                              # (D, 4D)
    b5_t = b5.T                              # (D, 1)
    w6_t = w6.T                              # (1, D)
    b6_c = b6.reshape(1, 1)                  # (1, 1)
    return (wf.astype(compute_dtype), w5_t.astype(compute_dtype),
            b5_t.astype(jnp.float32), w6_t.astype(compute_dtype),
            b6_c.astype(jnp.float32))


def build_input_slab(s_material, s_step, a_elem, a_comp, compute_dtype):
    """Transposed, lane-dense [KIN, B] slab in compute_dtype (row 63 = ones)."""
    B = s_material.shape[0]
    ct = compute_dtype
    return jnp.concatenate(
        [s_material.astype(ct).T, s_step.astype(ct).T,
         a_elem.astype(ct).T, a_comp.astype(ct).T,
         jnp.ones((1, B), ct)], axis=0)       # (KIN, B)


# ---- Forward wrapper ---------------------------------------------------------
def dqn_forward(s_material, s_step, a_elem, a_comp, fused, *,
                batch_tile=DEFAULT_BATCH_TILE):
    wf, w5_t, b5_t, w6_t, b6_c = fused
    compute_dtype = wf.dtype
    D = INTERMEDIATE_DIM
    B = s_material.shape[0]

    x_t = build_input_slab(s_material, s_step, a_elem, a_comp, compute_dtype)

    # --- tile selection ------------------------------------------------------
    if B <= 256:
        tb = B                         # tiny-inference: single full-dim block
    else:
        # >=2 lane-aligned tiles (keeps both v7x TensorCores busy), <= batch_tile
        tb = min(batch_tile, _round_up((B + 1) // 2, LANES))
    b_pad = _round_up(B, tb)
    num_tiles = b_pad // tb
    if b_pad != B:
        x_t = jnp.pad(x_t, ((0, 0), (0, b_pad - B)))

    itemsize = jnp.dtype(compute_dtype).itemsize
    # True MACs only (block-diagonal structural zeros excluded).
    flops = 2 * b_pad * (CONCAT_RAW * D + 4 * D * D + D * 1)
    bytes_accessed = (b_pad * KIN * itemsize +          # input slab
                      b_pad * 4 +                       # (1, b_pad) f32 output
                      (wf.size + w5_t.size + w6_t.size) * itemsize +
                      (b5_t.size + b6_c.size) * 4)

    const = lambda i: (0, 0)   # weights/biases: same block every grid step
    grid_spec = pltpu.PrefetchScalarGridSpec(
        num_scalar_prefetch=0,
        grid=(num_tiles,),
        in_specs=[
            pl.BlockSpec((KIN, tb), lambda i: (0, i)),   # x_t tile
            pl.BlockSpec((4 * D, KIN), const),           # fused branch weight
            pl.BlockSpec((D, 4 * D), const),             # W5^T
            pl.BlockSpec((D, 1), const),                 # b5^T
            pl.BlockSpec((1, D), const),                 # w6^T
            pl.BlockSpec((1, 1), const),                 # b6
        ],
        out_specs=pl.BlockSpec((1, tb), lambda i: (0, i)),
    )

    q_t = pl.pallas_call(
        dqn_kernel,
        out_shape=jax.ShapeDtypeStruct((1, b_pad), jnp.float32),
        grid_spec=grid_spec,
        compiler_params=pltpu.CompilerParams(
            dimension_semantics=("parallel",)),
        cost_estimate=pl.CostEstimate(
            flops=flops, transcendentals=0, bytes_accessed=bytes_accessed),
    )(x_t, wf, w5_t, b5_t, w6_t, b6_c)

    return q_t[0, :B].reshape(B, 1)


# ---- Params & pure-JAX reference --------------------------------------------
def init_params(key):
    """Deterministic parameter init (shapes match the PyTorch module)."""
    D = INTERMEDIATE_DIM
    dims = [
        (N_FEATURES, D),      # fc1
        (MAX_STEP_SIZE, D),   # fc2
        (NUM_ELEM, D),        # fc3
        (NUM_COMP, D),        # fc4
        (4 * D, D),           # fc5
        (D, 1),               # fc6
    ]
    params = []
    for fan_in, fan_out in dims:
        kw, kb, key = jax.random.split(key, 3)
        bound = 1.0 / jnp.sqrt(float(fan_in))
        w = jax.random.uniform(kw, (fan_in, fan_out), jnp.float32, -bound, bound)
        b = jax.random.uniform(kb, (1, fan_out), jnp.float32, -bound, bound)
        params += [w, b]
    return params


def dqn_reference(s_material, s_step, a_elem, a_comp, params):
    (w1, b1, w2, b2, w3, b3, w4, b4, w5, b5, w6, b6) = params
    h1 = _leaky_relu(s_material @ w1 + b1)
    h2 = _leaky_relu(s_step.astype(jnp.float32) @ w2 + b2)
    h3 = _leaky_relu(a_elem.astype(jnp.float32) @ w3 + b3)
    h4 = _leaky_relu(a_comp.astype(jnp.float32) @ w4 + b4)
    h = jnp.concatenate([h1, h2, h3, h4], axis=1)
    h = _leaky_relu(h @ w5 + b5)
    return h @ w6 + b6


def make_inputs(B, key):
    k1, k2, k3, k4 = jax.random.split(key, 4)
    s_material = jax.random.normal(k1, (B, N_FEATURES), jnp.float32)
    # s_step / a_elem / a_comp are cast with .float() in PyTorch -> build them
    # as one-hot integer tensors and cast inside the wrapper/reference.
    s_step = jax.nn.one_hot(
        jax.random.randint(k2, (B,), 0, MAX_STEP_SIZE), MAX_STEP_SIZE,
        dtype=jnp.int32)
    a_elem = jax.nn.one_hot(
        jax.random.randint(k3, (B,), 0, NUM_ELEM), NUM_ELEM, dtype=jnp.int32)
    a_comp = jax.nn.one_hot(
        jax.random.randint(k4, (B,), 0, NUM_COMP), NUM_COMP, dtype=jnp.int32)
    return s_material, s_step, a_elem, a_comp


if __name__ == "__main__":
    key = jax.random.PRNGKey(0)
    kp, kin_small, kin_big = jax.random.split(key, 3)
    params = init_params(kp)

    # Fuse once per parameter update (hoisted out of the per-call path).
    fused_f32 = fuse_params(params, jnp.float32)
    fused_bf16 = fuse_params(params, jnp.bfloat16)
    fwd_f32 = jax.jit(lambda a, b, c, d: dqn_forward(a, b, c, d, fused_f32))
    fwd_bf16 = jax.jit(lambda a, b, c, d: dqn_forward(a, b, c, d, fused_bf16))

    # --- Test 1: tiny batch (single-block path), f32 -------------------------
    B = 2
    inputs = make_inputs(B, kin_small)
    q = jax.block_until_ready(fwd_f32(*inputs))
    q_ref = dqn_reference(*inputs, params)
    assert q.shape == (B, 1)
    assert jnp.allclose(q, q_ref, atol=1e-4, rtol=1e-4)

    # --- Test 2: larger batch (tiled, >=2 tiles, row-padded path), f32 -------
    B_big = 1037
    inputs_big = make_inputs(B_big, kin_big)
    q_big = jax.block_until_ready(fwd_f32(*inputs_big))
    q_big_ref = dqn_reference(*inputs_big, params)
    assert q_big.shape == (B_big, 1)
    assert jnp.allclose(q_big, q_big_ref, atol=1e-4, rtol=1e-4)

    # --- Test 3: bf16 operand-storage path, checked against f32 reference ----
    q_bf16 = jax.block_until_ready(fwd_bf16(*inputs_big))
    assert q_bf16.shape == (B_big, 1)
    assert bool(jnp.isfinite(q_bf16).all())
    assert jnp.allclose(q_bf16, q_big_ref, atol=0.1, rtol=0.1)

    print("KERNEL_OK")
</pallas_src>

<mosaic_0001>
module attributes {stable_mosaic.version = 11 : i64} {
  func.func @dqn_kernel(%arg0: i32, %arg1: memref<64x2xf32, #tpu.memory_space<vmem>>, %arg2: memref<256x64xf32, #tpu.memory_space<vmem>>, %arg3: memref<64x256xf32, #tpu.memory_space<vmem>>, %arg4: memref<64x1xf32, #tpu.memory_space<vmem>>, %arg5: memref<1x64xf32, #tpu.memory_space<vmem>>, %arg6: memref<1x1xf32, #tpu.memory_space<vmem>>, %arg7: memref<1x2xf32, #tpu.memory_space<vmem>>) attributes {dimension_semantics = [#tpu.dimension_semantics<parallel>], iteration_bounds = array<i64: 1>, scalar_prefetch = 0 : i64, scratch_operands = 0 : i64, tpu.core_type = #tpu.core_type<tc>, window_params = [{transform_indices = @transform_0, window_bounds = array<i64: 64, 2>}, {pipeline_mode = #tpu.pipeline_mode<synchronous>, transform_indices = @transform_1, window_bounds = array<i64: 256, 64>}, {pipeline_mode = #tpu.pipeline_mode<synchronous>, transform_indices = @transform_2, window_bounds = array<i64: 64, 256>}, {pipeline_mode = #tpu.pipeline_mode<synchronous>, transform_indices = @transform_3, window_bounds = array<i64: 64, 1>}, {pipeline_mode = #tpu.pipeline_mode<synchronous>, transform_indices = @transform_4, window_bounds = array<i64: 1, 64>}, {pipeline_mode = #tpu.pipeline_mode<synchronous>, transform_indices = @transform_5, window_bounds = array<i64: 1, 1>}, {transform_indices = @transform_6, window_bounds = array<i64: 1, 2>}]} {
    %c0 = arith.constant 0 : index
    %c0_0 = arith.constant 0 : index
    %0 = vector.load %arg2[%c0, %c0_0] : memref<256x64xf32, #tpu.memory_space<vmem>>, vector<256x64xf32>
    %c0_1 = arith.constant 0 : index
    %c0_2 = arith.constant 0 : index
    %1 = vector.load %arg1[%c0_1, %c0_2] : memref<64x2xf32, #tpu.memory_space<vmem>>, vector<64x2xf32>
    %cst = arith.constant dense<0.000000e+00> : vector<256x2xf32>
    %2 = tpu.matmul %0, %1, %cst {dimension_numbers = #tpu.dot_dimension_numbers<[1], [0], [0], [1], [0, 0, 1, 1], [], []>} : vector<256x64xf32>, vector<64x2xf32>, vector<256x2xf32> -> vector<256x2xf32>
    %cst_3 = arith.constant 0.000000e+00 : f32
    %3 = vector.broadcast %cst_3 : f32 to vector<256x2xf32>
    %4 = arith.cmpf ogt, %2, %3 : vector<256x2xf32>
    %cst_4 = arith.constant 0.00999999977 : f32
    %5 = vector.broadcast %cst_4 : f32 to vector<256x2xf32>
    %6 = arith.mulf %5, %2 : vector<256x2xf32>
    %7 = arith.select %4, %2, %6 : vector<256x2xi1>, vector<256x2xf32>
    %c0_5 = arith.constant 0 : index
    %c0_6 = arith.constant 0 : index
    %8 = vector.load %arg3[%c0_5, %c0_6] : memref<64x256xf32, #tpu.memory_space<vmem>>, vector<64x256xf32>
    %cst_7 = arith.constant dense<0.000000e+00> : vector<64x2xf32>
    %9 = tpu.matmul %8, %7, %cst_7 {dimension_numbers = #tpu.dot_dimension_numbers<[1], [0], [0], [1], [0, 0, 1, 1], [], []>} : vector<64x256xf32>, vector<256x2xf32>, vector<64x2xf32> -> vector<64x2xf32>
    %c0_8 = arith.constant 0 : index
    %c0_9 = arith.constant 0 : index
    %10 = vector.load %arg4[%c0_8, %c0_9] : memref<64x1xf32, #tpu.memory_space<vmem>>, vector<64x1xf32>
    %11 = vector.broadcast %10 : vector<64x1xf32> to vector<64x2xf32>
    %12 = arith.addf %9, %11 : vector<64x2xf32>
    %cst_10 = arith.constant 0.000000e+00 : f32
    %13 = vector.broadcast %cst_10 : f32 to vector<64x2xf32>
    %14 = arith.cmpf ogt, %12, %13 : vector<64x2xf32>
    %cst_11 = arith.constant 0.00999999977 : f32
    %15 = vector.broadcast %cst_11 : f32 to vector<64x2xf32>
    %16 = arith.mulf %15, %12 : vector<64x2xf32>
    %17 = arith.select %14, %12, %16 : vector<64x2xi1>, vector<64x2xf32>
    %c0_12 = arith.constant 0 : index
    %c0_13 = arith.constant 0 : index
    %18 = vector.load %arg5[%c0_12, %c0_13] : memref<1x64xf32, #tpu.memory_space<vmem>>, vector<1x64xf32>
    %cst_14 = arith.constant dense<0.000000e+00> : vector<1x2xf32>
    %19 = tpu.matmul %18, %17, %cst_14 {dimension_numbers = #tpu.dot_dimension_numbers<[1], [0], [0], [1], [0, 0, 1, 1], [], []>} : vector<1x64xf32>, vector<64x2xf32>, vector<1x2xf32> -> vector<1x2xf32>
    %c0_15 = arith.constant 0 : index
    %c0_16 = arith.constant 0 : index
    %20 = vector.load %arg6[%c0_15, %c0_16] : memref<1x1xf32, #tpu.memory_space<vmem>>, vector<1x1xf32>
    %21 = vector.broadcast %20 : vector<1x1xf32> to vector<1x2xf32>
    %22 = arith.addf %19, %21 : vector<1x2xf32>
    %c0_17 = arith.constant 0 : index
    %c0_18 = arith.constant 0 : index
    %23 = vector.load %arg7[%c0_17, %c0_18] : memref<1x2xf32, #tpu.memory_space<vmem>>, vector<1x2xf32>
    tpu.vector_store %arg7[%c0_17, %c0_18], %22 {strides = array<i32>} : memref<1x2xf32, #tpu.memory_space<vmem>>, vector<1x2xf32>,
    return
  }
  func.func @transform_0(%arg0: i32) -> (i32, i32) {
    %c0_i32 = arith.constant 0 : i32
    %c0_i32_0 = arith.constant 0 : i32
    return %c0_i32, %arg0 : i32, i32
  }
  func.func @transform_1(%arg0: i32) -> (i32, i32) {
    %c0_i32 = arith.constant 0 : i32
    %c0_i32_0 = arith.constant 0 : i32
    %c0_i32_1 = arith.constant 0 : i32
    return %c0_i32, %c0_i32_0 : i32, i32
  }
  func.func @transform_2(%arg0: i32) -> (i32, i32) {
    %c0_i32 = arith.constant 0 : i32
    %c0_i32_0 = arith.constant 0 : i32
    %c0_i32_1 = arith.constant 0 : i32
    return %c0_i32, %c0_i32_0 : i32, i32
  }
  func.func @transform_3(%arg0: i32) -> (i32, i32) {
    %c0_i32 = arith.constant 0 : i32
    %c0_i32_0 = arith.constant 0 : i32
    %c0_i32_1 = arith.constant 0 : i32
    return %c0_i32, %c0_i32_0 : i32, i32
  }
  func.func @transform_4(%arg0: i32) -> (i32, i32) {
    %c0_i32 = arith.constant 0 : i32
    %c0_i32_0 = arith.constant 0 : i32
    %c0_i32_1 = arith.constant 0 : i32
    return %c0_i32, %c0_i32_0 : i32, i32
  }
  func.func @transform_5(%arg0: i32) -> (i32, i32) {
    %c0_i32 = arith.constant 0 : i32
    %c0_i32_0 = arith.constant 0 : i32
    %c0_i32_1 = arith.constant 0 : i32
    return %c0_i32, %c0_i32_0 : i32, i32
  }
  func.func @transform_6(%arg0: i32) -> (i32, i32) {
    %c0_i32 = arith.constant 0 : i32
    %c0_i32_0 = arith.constant 0 : i32
    return %c0_i32, %arg0 : i32, i32
  }
}

</mosaic_0001>

<llo_original>
// kernel: _lambda_.1
$region0: #{_lambda_.1}
  #allocation0 [shape = 'u32[]', space=smem, size = 0x4, offset = 0x4, fixed_abs, tag = 'smem constant byte address 0x4 - core index']
  #allocation1 [shape = 'u32[144,128]{1,0:T(1,128)}', space=vmem, size = 0x12000, scoped, tag = 'internal scratch']
  #allocation2 [shape = 'f32[1,1]{1,0:T(1,128)S(1)}', space=vmem, size = 0x200, scoped, tag = 'scoped memory for _lambda_.1']
  %s0 = inlined_call_operand.vmem [shape: f32[64,2], index: 0, kind: input, shape index: {}]
  %s1 = inlined_call_operand.hbm [shape: f32[256,64], index: 1, kind: input, shape index: {}]
  %s2 = inlined_call_operand.hbm [shape: f32[64,256], index: 2, kind: input, shape index: {}]
  %s3 = inlined_call_operand.vmem [shape: f32[64,1], index: 3, kind: input, shape index: {}]
  %s4 = inlined_call_operand.vmem [shape: f32[1,64], index: 4, kind: input, shape index: {}]
  %s5 = inlined_call_operand.<no memory space> [shape: f32[1,1], index: 5, kind: input, shape index: {}]
  %s6 = inlined_call_operand.hbm [shape: f32[1,2], index: 6, kind: output, shape index: {}]
  %s7 = sld [smem:[#allocation0]]
  $region42: #{_lambda_.1} parent=0
    _
  %s9 = ssub.s32 1, %s7
  %s10 = scalar_select 0, %s9, %s7
  %v11 = vstv %s5
  %12 = vst [vmem:[#allocation2] sm:$0x1] %v11
  $region1: #{_lambda_.1} parent=0
    #allocation3 [shape = 'u8[131072]{0}', space=vmem, size = 0x20000, scoped, tag = 'input window, operand 1, single buffered']
    #allocation4 [shape = 's32[1]{0}', space=sflag, size = 0x4, scoped, tag = 'scoped memory for _lambda_.1']
    #allocation5 [shape = 's32[1]{0}', space=sflag, size = 0x4, scoped, tag = 'scoped memory for _lambda_.1']
    #allocation6 [shape = 'u8[65536]{0}', space=vmem, size = 0x10000, scoped, tag = 'input window, operand 2, single buffered']
    #allocation7 [shape = 's32[1]{0}', space=sflag, size = 0x4, scoped, tag = 'scoped memory for _lambda_.1']
    #allocation8 [shape = 'u8[512]{0}', space=vmem, size = 0x400, scoped, tag = 'output window, operand 0, single buffered']
    %13 = vsyncpa [#allocation4], 0
    %14 = vsyncpa [#allocation7], 0
    %15 = vsyncpa [#allocation5], 0
    // Predicated region
    $region2: #{_lambda_.1} parent=1 // pred_check
      _
    $region3: #{_lambda_.1} parent=1 // pred_check_branch
      %17 = sbr.rel (0) target = $region5
    $region4: #{_lambda_.1} parent=1 // pred_region
      _
    $region5: #{_lambda_.1} parent=1 // pred_fallthru
      _
    // Predicated region
    $region6: #{_lambda_.1} parent=1 // pred_check
      _
    $region7: #{_lambda_.1} parent=1 // pred_check_branch
      %19 = sbr.rel (0) target = $region9
    $region8: #{_lambda_.1} parent=1 // pred_region
      %s21 = ssub.s32 4096, 4096
      %22 = vsyncadd [#allocation4], %s21
      %s23 = sshll.u32 [#allocation3], 4
      %s24 = int_to_ptr.vmem [resolvable:$true] %s23
      %29 = dma.hbm_to_vmem [thread:$0]  %s1, 4096, %s24, [#allocation4], 128, 128, 8
    $region9: #{_lambda_.1} parent=1 // pred_fallthru
      _
    // Predicated region
    $region10: #{_lambda_.1} parent=1 // pred_check
      _
    $region11: #{_lambda_.1} parent=1 // pred_check_branch
      %31 = sbr.rel (0) target = $region13
    $region12: #{_lambda_.1} parent=1 // pred_region
      %s33 = ssub.s32 2048, 2048
      %34 = vsyncadd [#allocation7], %s33
      %s35 = sshll.u32 [#allocation6], 4
      %s36 = int_to_ptr.vmem [resolvable:$true] %s35
      %41 = dma.hbm_to_vmem [thread:$0]  %s2, 2048, %s36, [#allocation7], 256, 256, 16
    $region13: #{_lambda_.1} parent=1 // pred_fallthru
      _
    // Predicated region
    $region14: #{_lambda_.1} parent=1 // pred_check
      _
    $region15: #{_lambda_.1} parent=1 // pred_check_branch
      %43 = sbr.rel (0) target = $region17
    $region16: #{_lambda_.1} parent=1 // pred_region
      _
    $region17: #{_lambda_.1} parent=1 // pred_fallthru
      _
    // Predicated region
    $region18: #{_lambda_.1} parent=1 // pred_check
      _
    $region19: #{_lambda_.1} parent=1 // pred_check_branch
      %45 = sbr.rel (0) target = $region21
    $region20: #{_lambda_.1} parent=1 // pred_region
      _
    $region21: #{_lambda_.1} parent=1 // pred_fallthru
      _
    // Predicated region
    $region22: #{_lambda_.1} parent=1 // pred_check
      _
    $region23: #{_lambda_.1} parent=1 // pred_check_branch
      %47 = sbr.rel (0) target = $region25
    $region24: #{_lambda_.1} parent=1 // pred_region
      _
    $region25: #{_lambda_.1} parent=1 // pred_fallthru
      _
    // Predicated region
    $region26: #{_lambda_.1} parent=1 // pred_check
      _
    $region27: #{_lambda_.1} parent=1 // pred_check_branch
      %49 = sbr.rel (0) target = $region29
    $region28: #{_lambda_.1} parent=1 // pred_region
      %50 = dma.done [#allocation4], 4096
    $region29: #{_lambda_.1} parent=1 // pred_fallthru
      _
    // Predicated region
    $region30: #{_lambda_.1} parent=1 // pred_check
      _
    $region31: #{_lambda_.1} parent=1 // pred_check_branch
      %52 = sbr.rel (0) target = $region33
    $region32: #{_lambda_.1} parent=1 // pred_region
      %53 = dma.done [#allocation7], 2048
    $region33: #{_lambda_.1} parent=1 // pred_fallthru
      _
    %v54 = vld [vmem:[#allocation3] sm:$0xff]
    %v55 = vld [vmem:[#allocation3 + $0x8] sm:$0xff]
    %v56 = vld [vmem:[#allocation3 + $0x10] sm:$0xff]
    %v57 = vld [vmem:[#allocation3 + $0x18] sm:$0xff]
    %v58 = vld [vmem:[#allocation3 + $0x20] sm:$0xff]
    %v59 = vld [vmem:[#allocation3 + $0x28] sm:$0xff]
    %v60 = vld [vmem:[#allocation3 + $0x30] sm:$0xff]
    %v61 = vld [vmem:[#allocation3 + $0x38] sm:$0xff]
    %v62 = vld [vmem:[#allocation3 + $0x40] sm:$0xff]
    %v63 = vld [vmem:[#allocation3 + $0x48] sm:$0xff]
    %v64 = vld [vmem:[#allocation3 + $0x50] sm:$0xff]
    %v65 = vld [vmem:[#allocation3 + $0x58] sm:$0xff]
    %v66 = vld [vmem:[#allocation3 + $0x60] sm:$0xff]
    %v67 = vld [vmem:[#allocation3 + $0x68] sm:$0xff]
    %v68 = vld [vmem:[#allocation3 + $0x70] sm:$0xff]
    %v69 = vld [vmem:[#allocation3 + $0x78] sm:$0xff]
    %v70 = vld [vmem:[#allocation3 + $0x80] sm:$0xff]
    %v71 = vld [vmem:[#allocation3 + $0x88] sm:$0xff]
    %v72 = vld [vmem:[#allocation3 + $0x90] sm:$0xff]
    %v73 = vld [vmem:[#allocation3 + $0x98] sm:$0xff]
    %v74 = vld [vmem:[#allocation3 + $0xa0] sm:$0xff]
    %v75 = vld [vmem:[#allocation3 + $0xa8] sm:$0xff]
    %v76 = vld [vmem:[#allocation3 + $0xb0] sm:$0xff]
    %v77 = vld [vmem:[#allocation3 + $0xb8] sm:$0xff]
    %v78 = vld [vmem:[#allocation3 + $0xc0] sm:$0xff]
    %v79 = vld [vmem:[#allocation3 + $0xc8] sm:$0xff]
    %v80 = vld [vmem:[#allocation3 + $0xd0] sm:$0xff]
    %v81 = vld [vmem:[#allocation3 + $0xd8] sm:$0xff]
    %v82 = vld [vmem:[#allocation3 + $0xe0] sm:$0xff]
    %v83 = vld [vmem:[#allocation3 + $0xe8] sm:$0xff]
    %v84 = vld [vmem:[#allocation3 + $0xf0] sm:$0xff]
    %v85 = vld [vmem:[#allocation3 + $0xf8] sm:$0xff]
    %v86 = vld [vmem:[%s0] sm:$0xff]
    %v87 = vld [vmem:[%s0 + $0x8] sm:$0xff]
    %v88 = vld [vmem:[%s0 + $0x10] sm:$0xff]
    %v89 = vld [vmem:[%s0 + $0x18] sm:$0xff]
    %v90 = vld [vmem:[%s0 + $0x20] sm:$0xff]
    %v91 = vld [vmem:[%s0 + $0x28] sm:$0xff]
    %v92 = vld [vmem:[%s0 + $0x30] sm:$0xff]
    %v93 = vld [vmem:[%s0 + $0x38] sm:$0xff]
    %vm94 = vcmask 523264
    %v96 = vsel %vm94, %v54, 0
    %v99 = vsel %vm94, %v55, 0
    %v102 = vsel %vm94, %v56, 0
    %v105 = vsel %vm94, %v57, 0
    %v108 = vsel %vm94, %v58, 0
    %v111 = vsel %vm94, %v59, 0
    %v114 = vsel %vm94, %v60, 0
    %v117 = vsel %vm94, %v61, 0
    %v120 = vsel %vm94, %v62, 0
    %v123 = vsel %vm94, %v63, 0
    %v126 = vsel %vm94, %v64, 0
    %v129 = vsel %vm94, %v65, 0
    %v132 = vsel %vm94, %v66, 0
    %v135 = vsel %vm94, %v67, 0
    %v138 = vsel %vm94, %v68, 0
    %v141 = vsel %vm94, %v69, 0
    %v144 = vsel %vm94, %v70, 0
    %v147 = vsel %vm94, %v71, 0
    %v150 = vsel %vm94, %v72, 0
    %v153 = vsel %vm94, %v73, 0
    %v156 = vsel %vm94, %v74, 0
    %v159 = vsel %vm94, %v75, 0
    %v162 = vsel %vm94, %v76, 0
    %v165 = vsel %vm94, %v77, 0
    %v168 = vsel %vm94, %v78, 0
    %v171 = vsel %vm94, %v79, 0
    %v174 = vsel %vm94, %v80, 0
    %v177 = vsel %vm94, %v81, 0
    %v180 = vsel %vm94, %v82, 0
    %v183 = vsel %vm94, %v83, 0
    %v186 = vsel %vm94, %v84, 0
    %v189 = vsel %vm94, %v85, 0
    %191 = vmatprep.subr.mxu0 0.0
    %192 = vmatpush1.msra.mxu0 %v86
    %193 = vmatprep.subr.mxu0 0.0
    %194 = vmatpush1.msra.mxu0 %v87
    %195 = vmatprep.subr.mxu0 0.0
    %196 = vmatpush1.msra.mxu0 %v88
    %197 = vmatprep.subr.mxu0 0.0
    %198 = vmatpush1.msra.mxu0 %v89
    %199 = vmatprep.subr.mxu0 0.0
    %200 = vmatpush1.msra.mxu0 %v90
    %201 = vmatprep.subr.mxu0 0.0
    %202 = vmatpush1.msra.mxu0 %v91
    %203 = vmatprep.subr.mxu0 0.0
    %204 = vmatpush1.msra.mxu0 %v92
    %205 = vmatprep.subr.mxu0 0.0
    %206 = vmatpush1.msra.mxu0 %v93
    %207 = vmatprep.subr.mxu0 0.0
    %208 = vmatpush1.msra.mxu0 0.0
    %209 = vmatprep.subr.mxu0 0.0
    %210 = vmatpush1.msra.mxu0 0.0
    %211 = vmatprep.subr.mxu0 0.0
    %212 = vmatpush1.msra.mxu0 0.0
    %213 = vmatprep.subr.mxu0 0.0
    %214 = vmatpush1.msra.mxu0 0.0
    %215 = vmatprep.subr.mxu0 0.0
    %216 = vmatpush1.msra.mxu0 0.0
    %217 = vmatprep.subr.mxu0 0.0
    %218 = vmatpush1.msra.mxu0 0.0
    %219 = vmatprep.subr.mxu0 0.0
    %220 = vmatpush1.msra.mxu0 0.0
    %221 = vmatprep.subr.mxu0 0.0
    %222 = vmatpush1.msra.mxu0 0.0
    %223 = vmatprep.subr.mxu0 0.0
    %224 = vmatpush1.msra.mxu0 0.0
    %225 = vmatprep.subr.mxu0 0.0
    %226 = vmatpush1.msra.mxu0 0.0
    %227 = vmatprep.subr.mxu0 0.0
    %228 = vmatpush1.msra.mxu0 0.0
    %229 = vmatprep.subr.mxu0 0.0
    %230 = vmatpush1.msra.mxu0 0.0
    %231 = vmatprep.subr.mxu0 0.0
    %232 = vmatpush1.msra.mxu0 0.0
    %233 = vmatprep.subr.mxu0 0.0
    %234 = vmatpush1.msra.mxu0 0.0
    %235 = vmatprep.subr.mxu0 0.0
    %236 = vmatpush1.msra.mxu0 0.0
    %237 = vmatprep.subr.mxu0 0.0
    %238 = vmatpush1.msra.mxu0 0.0
    %239 = vmatprep.subr.mxu0 0.0
    %240 = vmatpush1.msra.mxu0 0.0
    %241 = vmatprep.subr.mxu0 0.0
    %242 = vmatpush1.msra.mxu0 0.0
    %243 = vmatprep.subr.mxu0 0.0
    %244 = vmatpush1.msra.mxu0 0.0
    %245 = vmatprep.subr.mxu0 0.0
    %246 = vmatpush1.msra.mxu0 0.0
    %247 = vmatprep.subr.mxu0 0.0
    %248 = vmatpush1.msra.mxu0 0.0
    %249 = vmatprep.subr.mxu0 0.0
    %250 = vmatpush1.msra.mxu0 0.0
    %251 = vmatprep.subr.mxu0 0.0
    %252 = vmatpush1.msra.mxu0 0.0
    %253 = vmatprep.subr.mxu0 0.0
    %254 = vmatpush1.msra.mxu0 0.0
    %255 = vmatprep.mubr.f32.mxu0 0.0
    %256 = vmatmul.mubr.f32.gmra.mrb[0].mxu0 %v96
    %v257 = vpop.f32.mrb[0].mxu0
    %v258 = vadd.f32 0.0, %v257
    %v259 = vpop.f32.mrb[0].mxu0
    %260 = vmatprep.mubr.f32.mxu0 0.0
    %261 = vmatmul.mubr.f32.gmra.mrb[0].mxu0 %v99
    %v262 = vpop.f32.mrb[0].mxu0
    %v263 = vadd.f32 0.0, %v262
    %v264 = vpop.f32.mrb[0].mxu0
    %265 = vmatprep.mubr.f32.mxu0 0.0
    %266 = vmatmul.mubr.f32.gmra.mrb[0].mxu0 %v102
    %v267 = vpop.f32.mrb[0].mxu0
    %v268 = vadd.f32 0.0, %v267
    %v269 = vpop.f32.mrb[0].mxu0
    %270 = vmatprep.mubr.f32.mxu0 0.0
    %271 = vmatmul.mubr.f32.gmra.mrb[0].mxu0 %v105
    %v272 = vpop.f32.mrb[0].mxu0
    %v273 = vadd.f32 0.0, %v272
    %v274 = vpop.f32.mrb[0].mxu0
    %275 = vmatprep.mubr.f32.mxu0 0.0
    %276 = vmatmul.mubr.f32.gmra.mrb[0].mxu0 %v108
    %v277 = vpop.f32.mrb[0].mxu0
    %v278 = vadd.f32 0.0, %v277
    %v279 = vpop.f32.mrb[0].mxu0
    %280 = vmatprep.mubr.f32.mxu0 0.0
    %281 = vmatmul.mubr.f32.gmra.mrb[0].mxu0 %v111
    %v282 = vpop.f32.mrb[0].mxu0
    %v283 = vadd.f32 0.0, %v282
    %v284 = vpop.f32.mrb[0].mxu0
    %285 = vmatprep.mubr.f32.mxu0 0.0
    %286 = vmatmul.mubr.f32.gmra.mrb[0].mxu0 %v114
    %v287 = vpop.f32.mrb[0].mxu0
    %v288 = vadd.f32 0.0, %v287
    %v289 = vpop.f32.mrb[0].mxu0
    %290 = vmatprep.mubr.f32.mxu0 0.0
    %291 = vmatmul.mubr.f32.gmra.mrb[0].mxu0 %v117
    %v292 = vpop.f32.mrb[0].mxu0
    %v293 = vadd.f32 0.0, %v292
    %v294 = vpop.f32.mrb[0].mxu0
    %295 = vmatprep.mubr.f32.mxu0 0.0
    %296 = vmatmul.mubr.f32.gmra.mrb[0].mxu0 %v120
    %v297 = vpop.f32.mrb[0].mxu0
    %v298 = vadd.f32 0.0, %v297
    %v299 = vpop.f32.mrb[0].mxu0
    %300 = vmatprep.mubr.f32.mxu0 0.0
    %301 = vmatmul.mubr.f32.gmra.mrb[0].mxu0 %v123
    %v302 = vpop.f32.mrb[0].mxu0
    %v303 = vadd.f32 0.0, %v302
    %v304 = vpop.f32.mrb[0].mxu0
    %305 = vmatprep.mubr.f32.mxu0 0.0
    %306 = vmatmul.mubr.f32.gmra.mrb[0].mxu0 %v126
    %v307 = vpop.f32.mrb[0].mxu0
    %v308 = vadd.f32 0.0, %v307
    %v309 = vpop.f32.mrb[0].mxu0
    %310 = vmatprep.mubr.f32.mxu0 0.0
    %311 = vmatmul.mubr.f32.gmra.mrb[0].mxu0 %v129
    %v312 = vpop.f32.mrb[0].mxu0
    %v313 = vadd.f32 0.0, %v312
    %v314 = vpop.f32.mrb[0].mxu0
    %315 = vmatprep.mubr.f32.mxu0 0.0
    %316 = vmatmul.mubr.f32.gmra.mrb[0].mxu0 %v132
    %v317 = vpop.f32.mrb[0].mxu0
    %v318 = vadd.f32 0.0, %v317
    %v319 = vpop.f32.mrb[0].mxu0
    %320 = vmatprep.mubr.f32.mxu0 0.0
    %321 = vmatmul.mubr.f32.gmra.mrb[0].mxu0 %v135
    %v322 = vpop.f32.mrb[0].mxu0
    %v323 = vadd.f32 0.0, %v322
    %v324 = vpop.f32.mrb[0].mxu0
    %325 = vmatprep.mubr.f32.mxu0 0.0
    %326 = vmatmul.mubr.f32.gmra.mrb[0].mxu0 %v138
    %v327 = vpop.f32.mrb[0].mxu0
    %v328 = vadd.f32 0.0, %v327
    %v329 = vpop.f32.mrb[0].mxu0
    %330 = vmatprep.mubr.f32.mxu0 0.0
    %331 = vmatmul.mubr.f32.gmra.mrb[0].mxu0 %v141
    %v332 = vpop.f32.mrb[0].mxu0
    %v333 = vadd.f32 0.0, %v332
    %v334 = vpop.f32.mrb[0].mxu0
    %335 = vmatprep.mubr.f32.mxu0 0.0
    %336 = vmatmul.mubr.f32.gmra.mrb[0].mxu0 %v144
    %v337 = vpop.f32.mrb[0].mxu0
    %v338 = vadd.f32 0.0, %v337
    %v339 = vpop.f32.mrb[0].mxu0
    %340 = vmatprep.mubr.f32.mxu0 0.0
    %341 = vmatmul.mubr.f32.gmra.mrb[0].mxu0 %v147
    %v342 = vpop.f32.mrb[0].mxu0
    %v343 = vadd.f32 0.0, %v342
    %v344 = vpop.f32.mrb[0].mxu0
    %345 = vmatprep.mubr.f32.mxu0 0.0
    %346 = vmatmul.mubr.f32.gmra.mrb[0].mxu0 %v150
    %v347 = vpop.f32.mrb[0].mxu0
    %v348 = vadd.f32 0.0, %v347
    %v349 = vpop.f32.mrb[0].mxu0
    %350 = vmatprep.mubr.f32.mxu0 0.0
    %351 = vmatmul.mubr.f32.gmra.mrb[0].mxu0 %v153
    %v352 = vpop.f32.mrb[0].mxu0
    %v353 = vadd.f32 0.0, %v352
    %v354 = vpop.f32.mrb[0].mxu0
    %355 = vmatprep.mubr.f32.mxu0 0.0
    %356 = vmatmul.mubr.f32.gmra.mrb[0].mxu0 %v156
    %v357 = vpop.f32.mrb[0].mxu0
    %v358 = vadd.f32 0.0, %v357
    %v359 = vpop.f32.mrb[0].mxu0
    %360 = vmatprep.mubr.f32.mxu0 0.0
    %361 = vmatmul.mubr.f32.gmra.mrb[0].mxu0 %v159
    %v362 = vpop.f32.mrb[0].mxu0
    %v363 = vadd.f32 0.0, %v362
    %v364 = vpop.f32.mrb[0].mxu0
    %365 = vmatprep.mubr.f32.mxu0 0.0
    %366 = vmatmul.mubr.f32.gmra.mrb[0].mxu0 %v162
    %v367 = vpop.f32.mrb[0].mxu0
    %v368 = vadd.f32 0.0, %v367
    %v369 = vpop.f32.mrb[0].mxu0
    %370 = vmatprep.mubr.f32.mxu0 0.0
    %371 = vmatmul.mubr.f32.gmra.mrb[0].mxu0 %v165
    %v372 = vpop.f32.mrb[0].mxu0
    %v373 = vadd.f32 0.0, %v372
    %v374 = vpop.f32.mrb[0].mxu0
    %375 = vmatprep.mubr.f32.mxu0 0.0
    %376 = vmatmul.mubr.f32.gmra.mrb[0].mxu0 %v168
    %v377 = vpop.f32.mrb[0].mxu0
    %v378 = vadd.f32 0.0, %v377
    %v379 = vpop.f32.mrb[0].mxu0
    %380 = vmatprep.mubr.f32.mxu0 0.0
    %381 = vmatmul.mubr.f32.gmra.mrb[0].mxu0 %v171
    %v382 = vpop.f32.mrb[0].mxu0
    %v383 = vadd.f32 0.0, %v382
    %v384 = vpop.f32.mrb[0].mxu0
    %385 = vmatprep.mubr.f32.mxu0 0.0
    %386 = vmatmul.mubr.f32.gmra.mrb[0].mxu0 %v174
    %v387 = vpop.f32.mrb[0].mxu0
    %v388 = vadd.f32 0.0, %v387
    %v389 = vpop.f32.mrb[0].mxu0
    %390 = vmatprep.mubr.f32.mxu0 0.0
    %391 = vmatmul.mubr.f32.gmra.mrb[0].mxu0 %v177
    %v392 = vpop.f32.mrb[0].mxu0
    %v393 = vadd.f32 0.0, %v392
    %v394 = vpop.f32.mrb[0].mxu0
    %395 = vmatprep.mubr.f32.mxu0 0.0
    %396 = vmatmul.mubr.f32.gmra.mrb[0].mxu0 %v180
    %v397 = vpop.f32.mrb[0].mxu0
    %v398 = vadd.f32 0.0, %v397
    %v399 = vpop.f32.mrb[0].mxu0
    %400 = vmatprep.mubr.f32.mxu0 0.0
    %401 = vmatmul.mubr.f32.gmra.mrb[0].mxu0 %v183
    %v402 = vpop.f32.mrb[0].mxu0
    %v403 = vadd.f32 0.0, %v402
    %v404 = vpop.f32.mrb[0].mxu0
    %405 = vmatprep.mubr.f32.mxu0 0.0
    %406 = vmatmul.mubr.f32.gmra.mrb[0].mxu0 %v186
    %v407 = vpop.f32.mrb[0].mxu0
    %v408 = vadd.f32 0.0, %v407
    %v409 = vpop.f32.mrb[0].mxu0
    %410 = vmatprep.mubr.f32.mxu0 0.0
    %411 = vmatmul.mubr.f32.gmra.mrb[0].mxu0 %v189
    %v412 = vpop.f32.mrb[0].mxu0
    %v413 = vadd.f32 0.0, %v412
    %v414 = vpop.f32.mrb[0].mxu0
    %415 = vdwg.mxu0
    %vm416 = vcmp.gt.f32.partialorder %v258, 0.0
    %vm417 = vcmp.gt.f32.partialorder %v263, 0.0
    %vm418 = vcmp.gt.f32.partialorder %v268, 0.0
    %vm419 = vcmp.gt.f32.partialorder %v273, 0.0
    %vm420 = vcmp.gt.f32.partialorder %v278, 0.0
    %vm421 = vcmp.gt.f32.partialorder %v283, 0.0
    %vm422 = vcmp.gt.f32.partialorder %v288, 0.0
    %vm423 = vcmp.gt.f32.partialorder %v293, 0.0
    %vm424 = vcmp.gt.f32.partialorder %v298, 0.0
    %vm425 = vcmp.gt.f32.partialorder %v303, 0.0
    %vm426 = vcmp.gt.f32.partialorder %v308, 0.0
    %vm427 = vcmp.gt.f32.partialorder %v313, 0.0
    %vm428 = vcmp.gt.f32.partialorder %v318, 0.0
    %vm429 = vcmp.gt.f32.partialorder %v323, 0.0
    %vm430 = vcmp.gt.f32.partialorder %v328, 0.0
    %vm431 = vcmp.gt.f32.partialorder %v333, 0.0
    %vm432 = vcmp.gt.f32.partialorder %v338, 0.0
    %vm433 = vcmp.gt.f32.partialorder %v343, 0.0
    %vm434 = vcmp.gt.f32.partialorder %v348, 0.0
    %vm435 = vcmp.gt.f32.partialorder %v353, 0.0
    %vm436 = vcmp.gt.f32.partialorder %v358, 0.0
    %vm437 = vcmp.gt.f32.partialorder %v363, 0.0
    %vm438 = vcmp.gt.f32.partialorder %v368, 0.0
    %vm439 = vcmp.gt.f32.partialorder %v373, 0.0
    %vm440 = vcmp.gt.f32.partialorder %v378, 0.0
    %vm441 = vcmp.gt.f32.partialorder %v383, 0.0
    %vm442 = vcmp.gt.f32.partialorder %v388, 0.0
    %vm443 = vcmp.gt.f32.partialorder %v393, 0.0
    %vm444 = vcmp.gt.f32.partialorder %v398, 0.0
    %vm445 = vcmp.gt.f32.partialorder %v403, 0.0
    %vm446 = vcmp.gt.f32.partialorder %v408, 0.0
    %vm447 = vcmp.gt.f32.partialorder %v413, 0.0
    %v448 = vmul.f32 %v258, 0.01
    %v449 = vmul.f32 %v263, 0.01
    %v450 = vmul.f32 %v268, 0.01
    %v451 = vmul.f32 %v273, 0.01
    %v452 = vmul.f32 %v278, 0.01
    %v453 = vmul.f32 %v283, 0.01
    %v454 = vmul.f32 %v288, 0.01
    %v455 = vmul.f32 %v293, 0.01
    %v456 = vmul.f32 %v298, 0.01
    %v457 = vmul.f32 %v303, 0.01
    %v458 = vmul.f32 %v308, 0.01
    %v459 = vmul.f32 %v313, 0.01
    %v460 = vmul.f32 %v318, 0.01
    %v461 = vmul.f32 %v323, 0.01
    %v462 = vmul.f32 %v328, 0.01
    %v463 = vmul.f32 %v333, 0.01
    %v464 = vmul.f32 %v338, 0.01
    %v465 = vmul.f32 %v343, 0.01
    %v466 = vmul.f32 %v348, 0.01
    %v467 = vmul.f32 %v353, 0.01
    %v468 = vmul.f32 %v358, 0.01
    %v469 = vmul.f32 %v363, 0.01
    %v470 = vmul.f32 %v368, 0.01
    %v471 = vmul.f32 %v373, 0.01
    %v472 = vmul.f32 %v378, 0.01
    %v473 = vmul.f32 %v383, 0.01
    %v474 = vmul.f32 %v388, 0.01
    %v475 = vmul.f32 %v393, 0.01
    %v476 = vmul.f32 %v398, 0.01
    %v477 = vmul.f32 %v403, 0.01
    %v478 = vmul.f32 %v408, 0.01
    %v479 = vmul.f32 %v413, 0.01
    %v480 = vsel %vm416, %v258, %v448
    %v481 = vsel %vm417, %v263, %v449
    %v482 = vsel %vm418, %v268, %v450
    %v483 = vsel %vm419, %v273, %v451
    %v484 = vsel %vm420, %v278, %v452
    %v485 = vsel %vm421, %v283, %v453
    %v486 = vsel %vm422, %v288, %v454
    %v487 = vsel %vm423, %v293, %v455
    %v488 = vsel %vm424, %v298, %v456
    %v489 = vsel %vm425, %v303, %v457
    %v490 = vsel %vm426, %v308, %v458
    %v491 = vsel %vm427, %v313, %v459
    %v492 = vsel %vm428, %v318, %v460
    %v493 = vsel %vm429, %v323, %v461
    %v494 = vsel %vm430, %v328, %v462
    %v495 = vsel %vm431, %v333, %v463
    %v496 = vsel %vm432, %v338, %v464
    %v497 = vsel %vm433, %v343, %v465
    %v498 = vsel %vm434, %v348, %v466
    %v499 = vsel %vm435, %v353, %v467
    %v500 = vsel %vm436, %v358, %v468
    %v501 = vsel %vm437, %v363, %v469
    %v502 = vsel %vm438, %v368, %v470
    %v503 = vsel %vm439, %v373, %v471
    %v504 = vsel %vm440, %v378, %v472
    %v505 = vsel %vm441, %v383, %v473
    %v506 = vsel %vm442, %v388, %v474
    %v507 = vsel %vm443, %v393, %v475
    %v508 = vsel %vm444, %v398, %v476
    %v509 = vsel %vm445, %v403, %v477
    %v510 = vsel %vm446, %v408, %v478
    %v511 = vsel %vm447, %v413, %v479
    %v512 = vld [vmem:[#allocation6] sm:$0xff]
    %v513 = vld [vmem:[#allocation6 + $0x8] sm:$0xff]
    %v514 = vld [vmem:[#allocation6 + $0x10] sm:$0xff]
    %v515 = vld [vmem:[#allocation6 + $0x18] sm:$0xff]
    %v516 = vld [vmem:[#allocation6 + $0x20] sm:$0xff]
    %v517 = vld [vmem:[#allocation6 + $0x28] sm:$0xff]
    %v518 = vld [vmem:[#allocation6 + $0x30] sm:$0xff]
    %v519 = vld [vmem:[#allocation6 + $0x38] sm:$0xff]
    %v520 = vld [vmem:[#allocation6 + $0x40] sm:$0xff]
    %v521 = vld [vmem:[#allocation6 + $0x48] sm:$0xff]
    %v522 = vld [vmem:[#allocation6 + $0x50] sm:$0xff]
    %v523 = vld [vmem:[#allocation6 + $0x58] sm:$0xff]
    %v524 = vld [vmem:[#allocation6 + $0x60] sm:$0xff]
    %v525 = vld [vmem:[#allocation6 + $0x68] sm:$0xff]
    %v526 = vld [vmem:[#allocation6 + $0x70] sm:$0xff]
    %v527 = vld [vmem:[#allocation6 + $0x78] sm:$0xff]
    %v528 = vld [vmem:[%s3] sm:$0xff]
    %v529 = vld [vmem:[%s3 + $0x8] sm:$0xff]
    %v530 = vld [vmem:[%s3 + $0x10] sm:$0xff]
    %v531 = vld [vmem:[%s3 + $0x18] sm:$0xff]
    %v532 = vld [vmem:[%s3 + $0x20] sm:$0xff]
    %v533 = vld [vmem:[%s3 + $0x28] sm:$0xff]
    %v534 = vld [vmem:[%s3 + $0x30] sm:$0xff]
    %v535 = vld [vmem:[%s3 + $0x38] sm:$0xff]
    %537 = vset.pattern.permute.xlu0 0
    %538 = vperm.xlu0 %537, %v528
    %v539 = vpop.permute.xlu0 %538
    %542 = vset.pattern.permute.xlu0 0
    %543 = vperm.xlu0 %542, %v529
    %v544 = vpop.permute.xlu0 %543
    %547 = vset.pattern.permute.xlu0 0
    %548 = vperm.xlu0 %547, %v530
    %v549 = vpop.permute.xlu0 %548
    %552 = vset.pattern.permute.xlu0 0
    %553 = vperm.xlu0 %552, %v531
    %v554 = vpop.permute.xlu0 %553
    %557 = vset.pattern.permute.xlu0 0
    %558 = vperm.xlu0 %557, %v532
    %v559 = vpop.permute.xlu0 %558
    %562 = vset.pattern.permute.xlu0 0
    %563 = vperm.xlu0 %562, %v533
    %v564 = vpop.permute.xlu0 %563
    %567 = vset.pattern.permute.xlu0 0
    %568 = vperm.xlu0 %567, %v534
    %v569 = vpop.permute.xlu0 %568
    %572 = vset.pattern.permute.xlu0 0
    %573 = vperm.xlu0 %572, %v535
    %v574 = vpop.permute.xlu0 %573
    %576 = vmatprep.subr.mxu0 0.0
    %577 = vmatpush1.msra.mxu0 %v480
    %578 = vmatprep.subr.mxu0 0.0
    %579 = vmatpush1.msra.mxu0 %v481
    %580 = vmatprep.subr.mxu0 0.0
    %581 = vmatpush1.msra.mxu0 %v482
    %582 = vmatprep.subr.mxu0 0.0
    %583 = vmatpush1.msra.mxu0 %v483
    %584 = vmatprep.subr.mxu0 0.0
    %585 = vmatpush1.msra.mxu0 %v484
    %586 = vmatprep.subr.mxu0 0.0
    %587 = vmatpush1.msra.mxu0 %v485
    %588 = vmatprep.subr.mxu0 0.0
    %589 = vmatpush1.msra.mxu0 %v486
    %590 = vmatprep.subr.mxu0 0.0
    %591 = vmatpush1.msra.mxu0 %v487
    %592 = vmatprep.subr.mxu0 0.0
    %593 = vmatpush1.msra.mxu0 %v488
    %594 = vmatprep.subr.mxu0 0.0
    %595 = vmatpush1.msra.mxu0 %v489
    %596 = vmatprep.subr.mxu0 0.0
    %597 = vmatpush1.msra.mxu0 %v490
    %598 = vmatprep.subr.mxu0 0.0
    %599 = vmatpush1.msra.mxu0 %v491
    %600 = vmatprep.subr.mxu0 0.0
    %601 = vmatpush1.msra.mxu0 %v492
    %602 = vmatprep.subr.mxu0 0.0
    %603 = vmatpush1.msra.mxu0 %v493
    %604 = vmatprep.subr.mxu0 0.0
    %605 = vmatpush1.msra.mxu0 %v494
    %606 = vmatprep.subr.mxu0 0.0
    %607 = vmatpush1.msra.mxu0 %v495
    %608 = vmatprep.subr.mxu0 0.0
    %609 = vmatpush1.msra.mxu0 %v496
    %610 = vmatprep.subr.mxu0 0.0
    %611 = vmatpush1.msra.mxu0 %v497
    %612 = vmatprep.subr.mxu0 0.0
    %613 = vmatpush1.msra.mxu0 %v498
    %614 = vmatprep.subr.mxu0 0.0
    %615 = vmatpush1.msra.mxu0 %v499
    %616 = vmatprep.subr.mxu0 0.0
    %617 = vmatpush1.msra.mxu0 %v500
    %618 = vmatprep.subr.mxu0 0.0
    %619 = vmatpush1.msra.mxu0 %v501
    %620 = vmatprep.subr.mxu0 0.0
    %621 = vmatpush1.msra.mxu0 %v502
    %622 = vmatprep.subr.mxu0 0.0
    %623 = vmatpush1.msra.mxu0 %v503
    %624 = vmatprep.subr.mxu0 0.0
    %625 = vmatpush1.msra.mxu0 %v504
    %626 = vmatprep.subr.mxu0 0.0
    %627 = vmatpush1.msra.mxu0 %v505
    %628 = vmatprep.subr.mxu0 0.0
    %629 = vmatpush1.msra.mxu0 %v506
    %630 = vmatprep.subr.mxu0 0.0
    %631 = vmatpush1.msra.mxu0 %v507
    %632 = vmatprep.subr.mxu0 0.0
    %633 = vmatpush1.msra.mxu0 %v508
    %634 = vmatprep.subr.mxu0 0.0
    %635 = vmatpush1.msra.mxu0 %v509
    %636 = vmatprep.subr.mxu0 0.0
    %637 = vmatpush1.msra.mxu0 %v510
    %638 = vmatprep.subr.mxu0 0.0
    %639 = vmatpush1.msra.mxu0 %v511
    %640 = vmatprep.mubr.f32.mxu0 %v513
    %641 = vmatmul.mubr.f32.gmra.mrb[0].mxu0 %v512
    %v642 = vpop.f32.mrb[0].mxu0
    %v643 = vadd.f32 %v539, %v642
    %v644 = vpop.f32.mrb[0].mxu0
    %645 = vmatprep.mubr.f32.mxu0 %v515
    %646 = vmatmul.mubr.f32.gmra.mrb[0].mxu0 %v514
    %v647 = vpop.f32.mrb[0].mxu0
    %v648 = vadd.f32 %v544, %v647
    %v649 = vpop.f32.mrb[0].mxu0
    %650 = vmatprep.mubr.f32.mxu0 %v517
    %651 = vmatmul.mubr.f32.gmra.mrb[0].mxu0 %v516
    %v652 = vpop.f32.mrb[0].mxu0
    %v653 = vadd.f32 %v549, %v652
    %v654 = vpop.f32.mrb[0].mxu0
    %655 = vmatprep.mubr.f32.mxu0 %v519
    %656 = vmatmul.mubr.f32.gmra.mrb[0].mxu0 %v518
    %v657 = vpop.f32.mrb[0].mxu0
    %v658 = vadd.f32 %v554, %v657
    %v659 = vpop.f32.mrb[0].mxu0
    %660 = vmatprep.mubr.f32.mxu0 %v521
    %661 = vmatmul.mubr.f32.gmra.mrb[0].mxu0 %v520
    %v662 = vpop.f32.mrb[0].mxu0
    %v663 = vadd.f32 %v559, %v662
    %v664 = vpop.f32.mrb[0].mxu0
    %665 = vmatprep.mubr.f32.mxu0 %v523
    %666 = vmatmul.mubr.f32.gmra.mrb[0].mxu0 %v522
    %v667 = vpop.f32.mrb[0].mxu0
    %v668 = vadd.f32 %v564, %v667
    %v669 = vpop.f32.mrb[0].mxu0
    %670 = vmatprep.mubr.f32.mxu0 %v525
    %671 = vmatmul.mubr.f32.gmra.mrb[0].mxu0 %v524
    %v672 = vpop.f32.mrb[0].mxu0
    %v673 = vadd.f32 %v569, %v672
    %v674 = vpop.f32.mrb[0].mxu0
    %675 = vmatprep.mubr.f32.mxu0 %v527
    %676 = vmatmul.mubr.f32.gmra.mrb[0].mxu0 %v526
    %v677 = vpop.f32.mrb[0].mxu0
    %v678 = vadd.f32 %v574, %v677
    %v679 = vpop.f32.mrb[0].mxu0
    %680 = vdwg.mxu0
    %vm681 = vcmp.gt.f32.partialorder %v643, 0.0
    %vm682 = vcmp.gt.f32.partialorder %v648, 0.0
    %vm683 = vcmp.gt.f32.partialorder %v653, 0.0
    %vm684 = vcmp.gt.f32.partialorder %v658, 0.0
    %vm685 = vcmp.gt.f32.partialorder %v663, 0.0
    %vm686 = vcmp.gt.f32.partialorder %v668, 0.0
    %vm687 = vcmp.gt.f32.partialorder %v673, 0.0
    %vm688 = vcmp.gt.f32.partialorder %v678, 0.0
    %v689 = vmul.f32 %v643, 0.01
    %v690 = vmul.f32 %v648, 0.01
    %v691 = vmul.f32 %v653, 0.01
    %v692 = vmul.f32 %v658, 0.01
    %v693 = vmul.f32 %v663, 0.01
    %v694 = vmul.f32 %v668, 0.01
    %v695 = vmul.f32 %v673, 0.01
    %v696 = vmul.f32 %v678, 0.01
    %v697 = vsel %vm681, %v643, %v689
    %v698 = vsel %vm682, %v648, %v690
    %v699 = vsel %vm683, %v653, %v691
    %v700 = vsel %vm684, %v658, %v692
    %v701 = vsel %vm685, %v663, %v693
    %v702 = vsel %vm686, %v668, %v694
    %v703 = vsel %vm687, %v673, %v695
    %v704 = vsel %vm688, %v678, %v696
    %v705 = vld [vmem:[%s4] sm:$0x1]
    %v706 = vld [vmem:[#allocation2] sm:$0x1]
    %708 = vset.pattern.permute.xlu0 0
    %709 = vperm.xlu0 %708, %v706
    %v710 = vpop.permute.xlu0 %709
    %v712 = vlaneseq
    %v713 = vshrl.u32 %v712, 7
    %v714 = vsub.s32 0, %v713
    %v715 = vrot.slane %v710, %v714
    %v717 = vsel %vm94, %v705, 0
    %719 = vmatprep.subr.mxu0 0.0
    %720 = vmatpush1.msra.mxu0 %v697
    %721 = vmatprep.subr.mxu0 0.0
    %722 = vmatpush1.msra.mxu0 %v698
    %723 = vmatprep.subr.mxu0 0.0
    %724 = vmatpush1.msra.mxu0 %v699
    %725 = vmatprep.subr.mxu0 0.0
    %726 = vmatpush1.msra.mxu0 %v700
    %727 = vmatprep.subr.mxu0 0.0
    %728 = vmatpush1.msra.mxu0 %v701
    %729 = vmatprep.subr.mxu0 0.0
    %730 = vmatpush1.msra.mxu0 %v702
    %731 = vmatprep.subr.mxu0 0.0
    %732 = vmatpush1.msra.mxu0 %v703
    %733 = vmatprep.subr.mxu0 0.0
    %734 = vmatpush1.msra.mxu0 %v704
    %735 = vmatprep.subr.mxu0 0.0
    %736 = vmatpush1.msra.mxu0 0.0
    %737 = vmatprep.subr.mxu0 0.0
    %738 = vmatpush1.msra.mxu0 0.0
    %739 = vmatprep.subr.mxu0 0.0
    %740 = vmatpush1.msra.mxu0 0.0
    %741 = vmatprep.subr.mxu0 0.0
    %742 = vmatpush1.msra.mxu0 0.0
    %743 = vmatprep.subr.mxu0 0.0
    %744 = vmatpush1.msra.mxu0 0.0
    %745 = vmatprep.subr.mxu0 0.0
    %746 = vmatpush1.msra.mxu0 0.0
    %747 = vmatprep.subr.mxu0 0.0
    %748 = vmatpush1.msra.mxu0 0.0
    %749 = vmatprep.subr.mxu0 0.0
    %750 = vmatpush1.msra.mxu0 0.0
    %751 = vmatprep.subr.mxu0 0.0
    %752 = vmatpush1.msra.mxu0 0.0
    %753 = vmatprep.subr.mxu0 0.0
    %754 = vmatpush1.msra.mxu0 0.0
    %755 = vmatprep.subr.mxu0 0.0
    %756 = vmatpush1.msra.mxu0 0.0
    %757 = vmatprep.subr.mxu0 0.0
    %758 = vmatpush1.msra.mxu0 0.0
    %759 = vmatprep.subr.mxu0 0.0
    %760 = vmatpush1.msra.mxu0 0.0
    %761 = vmatprep.subr.mxu0 0.0
    %762 = vmatpush1.msra.mxu0 0.0
    %763 = vmatprep.subr.mxu0 0.0
    %764 = vmatpush1.msra.mxu0 0.0
    %765 = vmatprep.subr.mxu0 0.0
    %766 = vmatpush1.msra.mxu0 0.0
    %767 = vmatprep.subr.mxu0 0.0
    %768 = vmatpush1.msra.mxu0 0.0
    %769 = vmatprep.subr.mxu0 0.0
    %770 = vmatpush1.msra.mxu0 0.0
    %771 = vmatprep.subr.mxu0 0.0
    %772 = vmatpush1.msra.mxu0 0.0
    %773 = vmatprep.subr.mxu0 0.0
    %774 = vmatpush1.msra.mxu0 0.0
    %775 = vmatprep.subr.mxu0 0.0
    %776 = vmatpush1.msra.mxu0 0.0
    %777 = vmatprep.subr.mxu0 0.0
    %778 = vmatpush1.msra.mxu0 0.0
    %779 = vmatprep.subr.mxu0 0.0
    %780 = vmatpush1.msra.mxu0 0.0
    %781 = vmatprep.subr.mxu0 0.0
    %782 = vmatpush1.msra.mxu0 0.0
    %783 = vmatprep.mubr.f32.mxu0 0.0
    %784 = vmatmul.mubr.f32.gmra.mrb[0].mxu0 %v717
    %v785 = vpop.f32.mrb[0].mxu0
    %v786 = vadd.f32 %v715, %v785
    %v787 = vpop.f32.mrb[0].mxu0
    %788 = vdwg.mxu0
    %vm789 = vcmask 8192
    %790 = vst.msk [vmem:[#allocation8] sm:$0x1] %vm789, %v786
    // Predicated region
    $region34: #{_lambda_.1} parent=1 // pred_check
      _
    $region35: #{_lambda_.1} parent=1 // pred_check_branch
      %792 = sbr.rel (0) target = $region37
    $region36: #{_lambda_.1} parent=1 // pred_region
      %s794 = ssub.s32 16, 16
      %795 = vsyncadd [#allocation5], %s794
      %s797 = sshll.u32 [#allocation8], 4
      %s798 = int_to_ptr.vmem [resolvable:$true] %s797
      %800 = dma.vmem_to_hbm [thread:$0]  %s798, 16, %s6, [#allocation5]
    $region37: #{_lambda_.1} parent=1 // pred_fallthru
      _
    // Predicated region
    $region38: #{_lambda_.1} parent=1 // pred_check
      _
    $region39: #{_lambda_.1} parent=1 // pred_check_branch
      %802 = sbr.rel (0) target = $region41
    $region40: #{_lambda_.1} parent=1 // pred_region
      %803 = dma.done [#allocation5], 16
    $region41: #{_lambda_.1} parent=1 // pred_fallthru
      _
    %804 = vsyncpa [#allocation4], 1
    %805 = vsyncpa [#allocation7], 1
    %806 = vsyncpa [#allocation5], 1

</llo_original>
